<compile_context>
chip_gen: v6e
topology: v6e:2x2x1
jax: 0.10.0
libtpu: 0.0.40
codegen_flags: <defaults>
</compile_context>

<pallas_src>
import functools

import jax
import jax.numpy as jnp
from jax.experimental import pallas as pl
from jax.experimental.pallas import tpu as pltpu

_NEG_LARGE = -1e30  # finite "-inf" for padded logit lanes (exp underflows to 0)


def mnist_nn1_kernel(x_ref, w_ref, b_ref, o_ref):
    # Fused (lin1 o lin2): (TILE_B, input_dim) @ (input_dim, 128) + (1, 128)
    logits = jnp.dot(x_ref[...], w_ref[...],
                     preferred_element_type=jnp.float32) + b_ref[...]
    # Numerically stable log_softmax over the (padded) labels axis.
    # Padded lanes carry ~-1e30 -> exp underflows to 0, so they do not
    # contribute to the max (real lanes dominate) or to the sum.
    m = jnp.max(logits, axis=-1, keepdims=True)
    shifted = logits - m
    lse = jnp.log(jnp.sum(jnp.exp(shifted), axis=-1, keepdims=True))
    o_ref[...] = (shifted - lse).astype(o_ref.dtype)


def prepare_params(w1, b1, w2, b2, labels_pad=128):
    """One-time (offline) parameter prep: transpose + fold + lane-pad.

    w1: (inter_dim, input_dim)  PyTorch Linear layout (out, in)
    b1: (inter_dim,)
    w2: (labels_dim, inter_dim)
    b2: (labels_dim,)
    Returns (w_fold_padded (input_dim, labels_pad), b_fold_padded (1, labels_pad)).
    """
    w1_t = w1.T.astype(jnp.float32)            # (input_dim, inter_dim)
    w2_t = w2.T.astype(jnp.float32)            # (inter_dim, labels_dim)
    w_f = w1_t @ w2_t                          # (input_dim, labels_dim)
    b_f = b1.astype(jnp.float32) @ w2_t + b2.astype(jnp.float32)

    labels_dim = w_f.shape[1]
    pad = labels_pad - labels_dim
    w_pad = jnp.pad(w_f, ((0, 0), (0, pad)))                        # zero cols
    b_pad = jnp.pad(b_f, (0, pad), constant_values=_NEG_LARGE)      # -inf-ish
    return w_pad, b_pad.reshape(1, labels_pad)


@functools.partial(jax.jit, static_argnames=("labels_dim", "tile_b"))
def mnist_nn1_forward(imgs, w_pad, b_pad, *, labels_dim, tile_b=128):
    """Batched forward.  imgs: (B, ...) flattened per-row to (B, input_dim).

    For B == 1 this is exactly the original module's img.view(1, -1) path.
    Returns (B, labels_dim) float32 log-probabilities.
    """
    B = imgs.shape[0]
    x = imgs.reshape(B, -1).astype(jnp.float32)
    input_dim = x.shape[1]
    labels_pad = w_pad.shape[1]

    # Pad the batch up to a multiple of the tile; padded rows are sliced off.
    padded_b = pl.cdiv(B, tile_b) * tile_b
    if padded_b != B:
        x = jnp.pad(x, ((0, padded_b - B), (0, 0)))

    out = pl.pallas_call(
        mnist_nn1_kernel,
        out_shape=jax.ShapeDtypeStruct((padded_b, labels_pad), jnp.float32),
        grid=(padded_b // tile_b,),
        in_specs=[
            pl.BlockSpec((tile_b, input_dim), lambda i: (i, 0)),    # x tile
            pl.BlockSpec((input_dim, labels_pad), lambda i: (0, 0)),  # resident W
            pl.BlockSpec((1, labels_pad), lambda i: (0, 0)),          # resident b
        ],
        out_specs=pl.BlockSpec((tile_b, labels_pad), lambda i: (i, 0)),
        compiler_params=pltpu.CompilerParams(
            dimension_semantics=("parallel",)),   # megacore split on v7x
    )(x, w_pad, b_pad)

    return out[:B, :labels_dim]


def _init_params(key, input_dim, inter_dim, labels_dim):
    """Deterministic PyTorch-Linear-style init (uniform +- 1/sqrt(fan_in))."""
    k1, k2, k3, k4 = jax.random.split(key, 4)
    bound1 = 1.0 / (input_dim ** 0.5)
    bound2 = 1.0 / (inter_dim ** 0.5)
    w1 = jax.random.uniform(k1, (inter_dim, input_dim), jnp.float32,
                            minval=-bound1, maxval=bound1)
    b1 = jax.random.uniform(k2, (inter_dim,), jnp.float32,
                            minval=-bound1, maxval=bound1)
    w2 = jax.random.uniform(k3, (labels_dim, inter_dim), jnp.float32,
                            minval=-bound2, maxval=bound2)
    b2 = jax.random.uniform(k4, (labels_dim,), jnp.float32,
                            minval=-bound2, maxval=bound2)
    return w1, b1, w2, b2


if __name__ == "__main__":
    # MNIST-like shapes: 16x16 single-channel image -> input_dim = 256.
    input_dim, inter_dim, labels_dim = 16 * 16, 32, 10
    TILE_B = 128

    key = jax.random.PRNGKey(0)
    k_img, k_params = jax.random.split(key)
    w1, b1, w2, b2 = _init_params(k_params, input_dim, inter_dim, labels_dim)

    # One-time parameter prep (transpose + fold + pad) outside the hot path.
    w_pad, b_pad = prepare_params(w1, b1, w2, b2)

    # Batched call: 256 images -> 2 grid steps of 128 rows each.
    B = 256
    imgs = jax.random.normal(k_img, (B, 1, 16, 16), dtype=jnp.float32)  # NCHW
    out = mnist_nn1_forward(imgs, w_pad, b_pad,
                            labels_dim=labels_dim, tile_b=TILE_B)
    out = jax.block_until_ready(out)

    # Original-module semantics (single image, img.view(1, -1)).
    out1 = mnist_nn1_forward(imgs[:1], w_pad, b_pad,
                             labels_dim=labels_dim, tile_b=TILE_B)
    out1 = jax.block_until_ready(out1)

    # Pure-JAX reference: unfused lin1 -> lin2 -> log_softmax (matches PyTorch).
    x = imgs.reshape(B, -1)
    ref_logits = (x @ w1.T + b1) @ w2.T + b2
    ref = jax.nn.log_softmax(ref_logits, axis=1)

    assert out.shape == (B, labels_dim)
    assert jnp.allclose(out, ref, atol=1e-4), "batched mismatch vs reference"
    assert out1.shape == (1, labels_dim)
    assert jnp.allclose(out1, ref[:1], atol=1e-4), "single-image mismatch vs reference"

    print("KERNEL_OK")
</pallas_src>

<mosaic_0001>
module attributes {stable_mosaic.version = 11 : i64} {
  func.func @mnist_nn1_kernel(%arg0: i32, %arg1: memref<128x256xf32, #tpu.memory_space<vmem>>, %arg2: memref<256x128xf32, #tpu.memory_space<vmem>>, %arg3: memref<1x128xf32, #tpu.memory_space<vmem>>, %arg4: memref<128x128xf32, #tpu.memory_space<vmem>>) attributes {dimension_semantics = [#tpu.dimension_semantics<parallel>], iteration_bounds = array<i64: 2>, scalar_prefetch = 0 : i64, scratch_operands = 0 : i64, tpu.core_type = #tpu.core_type<tc>, window_params = [{transform_indices = @transform_0, window_bounds = array<i64: 128, 256>}, {pipeline_mode = #tpu.pipeline_mode<synchronous>, transform_indices = @transform_1, window_bounds = array<i64: 256, 128>}, {pipeline_mode = #tpu.pipeline_mode<synchronous>, transform_indices = @transform_2, window_bounds = array<i64: 1, 128>}, {transform_indices = @transform_3, window_bounds = array<i64: 128, 128>}]} {
    %c0 = arith.constant 0 : index
    %c0_0 = arith.constant 0 : index
    %0 = vector.load %arg1[%c0, %c0_0] : memref<128x256xf32, #tpu.memory_space<vmem>>, vector<128x256xf32>
    %c0_1 = arith.constant 0 : index
    %c0_2 = arith.constant 0 : index
    %1 = vector.load %arg2[%c0_1, %c0_2] : memref<256x128xf32, #tpu.memory_space<vmem>>, vector<256x128xf32>
    %cst = arith.constant dense<0.000000e+00> : vector<128x128xf32>
    %2 = tpu.matmul %0, %1, %cst {dimension_numbers = #tpu.dot_dimension_numbers<[1], [0], [0], [1], [0, 0, 1, 1], [], []>} : vector<128x256xf32>, vector<256x128xf32>, vector<128x128xf32> -> vector<128x128xf32>
    %c0_3 = arith.constant 0 : index
    %c0_4 = arith.constant 0 : index
    %3 = vector.load %arg3[%c0_3, %c0_4] : memref<1x128xf32, #tpu.memory_space<vmem>>, vector<1x128xf32>
    %4 = vector.broadcast %3 : vector<1x128xf32> to vector<128x128xf32>
    %5 = arith.addf %2, %4 : vector<128x128xf32>
    %cst_5 = arith.constant dense<0xFF800000> : vector<128xf32>
    %6 = vector.multi_reduction <maximumf>, %5, %cst_5 [1] : vector<128x128xf32> to vector<128xf32>
    %7 = vector.shape_cast %6 : vector<128xf32> to vector<128x1xf32>
    %8 = vector.broadcast %7 : vector<128x1xf32> to vector<128x128xf32>
    %9 = arith.subf %5, %8 : vector<128x128xf32>
    %10 = math.exp %9 : vector<128x128xf32>
    %cst_6 = arith.constant dense<0.000000e+00> : vector<128xf32>
    %11 = vector.multi_reduction <add>, %10, %cst_6 [1] : vector<128x128xf32> to vector<128xf32>
    %12 = vector.shape_cast %11 : vector<128xf32> to vector<128x1xf32>
    %13 = math.log %12 : vector<128x1xf32>
    %14 = vector.broadcast %13 : vector<128x1xf32> to vector<128x128xf32>
    %15 = arith.subf %9, %14 : vector<128x128xf32>
    %c0_7 = arith.constant 0 : index
    %c0_8 = arith.constant 0 : index
    %16 = vector.load %arg4[%c0_7, %c0_8] : memref<128x128xf32, #tpu.memory_space<vmem>>, vector<128x128xf32>
    tpu.vector_store %arg4[%c0_7, %c0_8], %15 {strides = array<i32>} : memref<128x128xf32, #tpu.memory_space<vmem>>, vector<128x128xf32>,
    return
  }
  func.func @transform_0(%arg0: i32) -> (i32, i32) {
    %c0_i32 = arith.constant 0 : i32
    %c0_i32_0 = arith.constant 0 : i32
    return %arg0, %c0_i32 : i32, i32
  }
  func.func @transform_1(%arg0: i32) -> (i32, i32) {
    %c0_i32 = arith.constant 0 : i32
    %c0_i32_0 = arith.constant 0 : i32
    %c0_i32_1 = arith.constant 0 : i32
    return %c0_i32, %c0_i32_0 : i32, i32
  }
  func.func @transform_2(%arg0: i32) -> (i32, i32) {
    %c0_i32 = arith.constant 0 : i32
    %c0_i32_0 = arith.constant 0 : i32
    %c0_i32_1 = arith.constant 0 : i32
    return %c0_i32, %c0_i32_0 : i32, i32
  }
  func.func @transform_3(%arg0: i32) -> (i32, i32) {
    %c0_i32 = arith.constant 0 : i32
    %c0_i32_0 = arith.constant 0 : i32
    return %arg0, %c0_i32 : i32, i32
  }
}

</mosaic_0001>

<llo_original>
// kernel: mnist_nn1_forward.1
$region0: #{mnist_nn1_forward.1}
  #allocation0 [shape = 'u32[]', space=smem, size = 0x4, offset = 0x4, fixed_abs, tag = 'smem constant byte address 0x4 - core index']
  #allocation1 [shape = 'u32[144,128]{1,0:T(1,128)}', space=vmem, size = 0x12000, scoped, tag = 'internal scratch']
  %s0 = inlined_call_operand.vmem [shape: f32[256,256], index: 0, kind: input, shape index: {}]
  %s1 = inlined_call_operand.vmem [shape: f32[256,128], index: 1, kind: input, shape index: {}]
  %s2 = inlined_call_operand.vmem [shape: f32[1,128], index: 2, kind: input, shape index: {}]
  %s3 = inlined_call_operand.vmem [shape: f32[256,128], index: 3, kind: output, shape index: {}]
  %s4 = sld [smem:[#allocation0]]
  $region45: #{mnist_nn1_forward.1} parent=0
    _
  %s6 = ssub.s32 1, %s4
  %s7 = scalar_select 0, %s6, %s4
  loop: start=0, step=1, limit=4
  $region2: #{mnist_nn1_forward.1} parent=0 // loop_pre_header
    _
  $region3: #{mnist_nn1_forward.1} parent=0 // loop_header
    %s9 = sphi 0, %s13
    %p10 = scmp.ge.s32.totalorder %s9, 4
    %s19 = sphi 0, %s21
    %s22 = sphi 0, %s19
    %s23 = sphi 0, %s22
    %s39 = sphi 0, %s23
    %s43 = sphi 0, %s43
    %s45 = sphi 0, %s43
    %s46 = sphi 0, %s45
    %s60 = sphi 0, %s46
    %s64 = sphi 0, %s64
    %s66 = sphi 0, %s64
    %s67 = sphi 0, %s66
    %s81 = sphi 0, %s67
    %s87 = sphi 0, %s89
    %s90 = sphi 0, %s87
    %s91 = sphi 0, %s90
    %s107 = sphi 0, %s91
  $region4: #{mnist_nn1_forward.1} parent=0 // loop_header_branch
    %12 = sbr.rel (%p10) target = $region8
  $region5: #{mnist_nn1_forward.1} parent=0 // loop_body
    %s14 = ssub.s32 %s9, 1
    %s15 = ssub.s32 %s9, 2
    %s16 = sadd.s32 %s9, 1
    %s17 = ssub.s32 %s9, %s16
    %p18 = scmp.eq.s32.totalorder %s17, 0
    %s20 = sadd.s32 %s19, 1
    %s21 = scalar_select %p18, %s19, %s20
    %p24 = pneg %p18
    %p25 = scmp.eq.s32.totalorder %s9, 1
    %p26 = por %p24, %p25
    %p27 = scmp.ne.s32.totalorder %s19, %s22
    %p28 = scmp.eq.s32.totalorder %s9, 0
    %p29 = por %p27, %p28
    %p30 = scmp.ne.s32.totalorder %s19, %s22
    %p31 = scmp.eq.s32.totalorder %s14, 1
    %p32 = por %p30, %p31
    %p33 = scmp.ne.s32.totalorder %s22, %s23
    %p34 = scmp.eq.s32.totalorder %s14, 0
    %p35 = por %p33, %p34
    %p36 = scmp.ne.s32.totalorder %s22, %s23
    %p37 = scmp.eq.s32.totalorder %s15, 1
    %p38 = por %p36, %p37
    %p40 = scmp.ne.s32.totalorder %s23, %s39
    %p41 = scmp.eq.s32.totalorder %s15, 0
    %p42 = por %p40, %p41
    %s44 = sadd.s32 %s43, 1
    %p47 = scmp.eq.s32.totalorder %s9, 1
    %p48 = scmp.ne.s32.totalorder %s43, %s45
    %p49 = scmp.eq.s32.totalorder %s9, 0
    %p50 = por %p48, %p49
    %p51 = scmp.ne.s32.totalorder %s43, %s45
    %p52 = scmp.eq.s32.totalorder %s14, 1
    %p53 = por %p51, %p52
    %p54 = scmp.ne.s32.totalorder %s45, %s46
    %p55 = scmp.eq.s32.totalorder %s14, 0
    %p56 = por %p54, %p55
    %p57 = scmp.ne.s32.totalorder %s45, %s46
    %p58 = scmp.eq.s32.totalorder %s15, 1
    %p59 = por %p57, %p58
    %p61 = scmp.ne.s32.totalorder %s46, %s60
    %p62 = scmp.eq.s32.totalorder %s15, 0
    %p63 = por %p61, %p62
    %s65 = sadd.s32 %s64, 1
    %p68 = scmp.eq.s32.totalorder %s9, 1
    %p69 = scmp.ne.s32.totalorder %s64, %s66
    %p70 = scmp.eq.s32.totalorder %s9, 0
    %p71 = por %p69, %p70
    %p72 = scmp.ne.s32.totalorder %s64, %s66
    %p73 = scmp.eq.s32.totalorder %s14, 1
    %p74 = por %p72, %p73
    %p75 = scmp.ne.s32.totalorder %s66, %s67
    %p76 = scmp.eq.s32.totalorder %s14, 0
    %p77 = por %p75, %p76
    %p78 = scmp.ne.s32.totalorder %s66, %s67
    %p79 = scmp.eq.s32.totalorder %s15, 1
    %p80 = por %p78, %p79
    %p82 = scmp.ne.s32.totalorder %s67, %s81
    %p83 = scmp.eq.s32.totalorder %s15, 0
    %p84 = por %p82, %p83
    %s85 = ssub.s32 %s9, %s16
    %p86 = scmp.eq.s32.totalorder %s85, 0
    %s88 = sadd.s32 %s87, 1
    %s89 = scalar_select %p86, %s87, %s88
    %p92 = pneg %p86
    %p93 = scmp.eq.s32.totalorder %s9, 1
    %p94 = por %p92, %p93
    %p95 = scmp.ne.s32.totalorder %s87, %s90
    %p96 = scmp.eq.s32.totalorder %s9, 0
    %p97 = por %p95, %p96
    %p98 = scmp.ne.s32.totalorder %s87, %s90
    %p99 = scmp.eq.s32.totalorder %s14, 1
    %p100 = por %p98, %p99
    %p101 = scmp.ne.s32.totalorder %s90, %s91
    %p102 = scmp.eq.s32.totalorder %s14, 0
    %p103 = por %p101, %p102
    %p104 = scmp.ne.s32.totalorder %s90, %s91
    %p105 = scmp.eq.s32.totalorder %s15, 1
    %p106 = por %p104, %p105
    %p108 = scmp.ne.s32.totalorder %s91, %s107
    %p109 = scmp.eq.s32.totalorder %s15, 0
    %p110 = por %p108, %p109
    %p111 = scmp.le.s32.totalorder 1, %s9
    %p112 = scmp.lt.s32.totalorder %s9, 3
    %p113 = pnand %p111, %p112
    %p114 = pneg %p113
    // Predicated region
    $region9: #{mnist_nn1_forward.1} parent=5 // pred_check
      _
    $region10: #{mnist_nn1_forward.1} parent=5 // pred_check_branch
      %116 = sbr.rel (%p113) target = $region12
    $region11: #{mnist_nn1_forward.1} parent=5 // pred_region
      %s117 = ssub.s32 %s9, 1
      // Predicated region
      $region13: #{mnist_nn1_forward.1} parent=11 // pred_check
        %p118 = pneg %p56
      $region14: #{mnist_nn1_forward.1} parent=11 // pred_check_branch
        %120 = sbr.rel (%p118) target = $region16
      $region15: #{mnist_nn1_forward.1} parent=11 // pred_region
        _
      $region16: #{mnist_nn1_forward.1} parent=11 // pred_fallthru
        _
      // Predicated region
      $region17: #{mnist_nn1_forward.1} parent=11 // pred_check
        %p121 = pneg %p77
      $region18: #{mnist_nn1_forward.1} parent=11 // pred_check_branch
        %123 = sbr.rel (%p121) target = $region20
      $region19: #{mnist_nn1_forward.1} parent=11 // pred_region
        _
      $region20: #{mnist_nn1_forward.1} parent=11 // pred_fallthru
        _
    $region12: #{mnist_nn1_forward.1} parent=5 // pred_fallthru
      _
    %p124 = scmp.lt.s32.totalorder %s9, 2
    // Predicated region
    $region21: #{mnist_nn1_forward.1} parent=5 // pred_check
      %p125 = pneg %p124
    $region22: #{mnist_nn1_forward.1} parent=5 // pred_check_branch
      %127 = sbr.rel (%p125) target = $region24
    $region23: #{mnist_nn1_forward.1} parent=5 // pred_region
      // Predicated region
      $region25: #{mnist_nn1_forward.1} parent=23 // pred_check
        %p128 = pneg %p29
      $region26: #{mnist_nn1_forward.1} parent=23 // pred_check_branch
        %130 = sbr.rel (%p128) target = $region28
      $region27: #{mnist_nn1_forward.1} parent=23 // pred_region
        %s131 = smul.u32 16, %s9
        %p132 = scmp.lt.s32.totalorder %s131, 31
        %s133 = scalar_select %p132, %s131, 31
        %s134 = smul.addr %s133, 2
        %s135 = smul.addr %s134, 8
        %s136 = scalar_lea.vmem %s0, %s135
        %s137 = smul.u32 16, %s9
      $region28: #{mnist_nn1_forward.1} parent=23 // pred_fallthru
        _
    $region24: #{mnist_nn1_forward.1} parent=5 // pred_fallthru
      _
    %p138 = scmp.le.s32.totalorder 1, %s9
    %p139 = scmp.lt.s32.totalorder %s9, 3
    %p140 = pnand %p138, %p139
    %p141 = pneg %p140
    // Predicated region
    $region29: #{mnist_nn1_forward.1} parent=5 // pred_check
      _
    $region30: #{mnist_nn1_forward.1} parent=5 // pred_check_branch
      %143 = sbr.rel (%p140) target = $region32
    $region31: #{mnist_nn1_forward.1} parent=5 // pred_region
      %s144 = ssub.s32 %s9, 1
      %s145 = smul.u32 16, %s14
      %p146 = scmp.lt.s32.totalorder %s145, 31
      %s147 = scalar_select %p146, %s145, 31
      %s148 = smul.addr %s147, 2
      %s149 = smul.addr %s148, 8
      %s150 = scalar_lea.vmem %s0, %s149
      %p151 = pneg %p35
      %p152 = pneg %p32
      %p153 = pneg %p56
      %p154 = pneg %p53
      %p155 = pneg %p77
      %p156 = pneg %p74
      %p157 = pneg %p103
      %p158 = pneg %p100
      %s159 = smul.u32 16, %s14
      %p160 = scmp.lt.s32.totalorder %s159, 31
      %s161 = scalar_select %p160, %s159, 31
      %s162 = smul.addr %s161, 8
      %s163 = scalar_lea.vmem %s3, %s162
      %s164 = smul.u32 16, %s14
      %p165 = scmp.lt.s32.totalorder %s164, 31
      %s166 = scalar_select %p165, %s164, 31
      %s167 = smul.addr %s166, 2
      %s168 = smul.addr %s167, 8
      %s169 = scalar_lea.vmem %s0, %s168
      %s170 = smul.u32 16, %s14
      %s171 = smul.u32 16, %s14
      %p172 = scmp.lt.s32.totalorder %s171, 31
      %s173 = scalar_select %p172, %s171, 31
      %s174 = smul.addr %s173, 8
      %s175 = scalar_lea.vmem %s3, %s174
      %s176 = smul.u32 16, %s14
      %v177 = vld [vmem:[%s169] sm:$0xff]
      %v178 = vld [vmem:[%s169 + $0x8] sm:$0xff]
      %v179 = vld [vmem:[%s169 + $0x10] sm:$0xff]
      %v180 = vld [vmem:[%s169 + $0x18] sm:$0xff]
      %v181 = vld [vmem:[%s169 + $0x20] sm:$0xff]
      %v182 = vld [vmem:[%s169 + $0x28] sm:$0xff]
      %v183 = vld [vmem:[%s169 + $0x30] sm:$0xff]
      %v184 = vld [vmem:[%s169 + $0x38] sm:$0xff]
      %v185 = vld [vmem:[%s169 + $0x40] sm:$0xff]
      %v186 = vld [vmem:[%s169 + $0x48] sm:$0xff]
      %v187 = vld [vmem:[%s169 + $0x50] sm:$0xff]
      %v188 = vld [vmem:[%s169 + $0x58] sm:$0xff]
      %v189 = vld [vmem:[%s169 + $0x60] sm:$0xff]
      %v190 = vld [vmem:[%s169 + $0x68] sm:$0xff]
      %v191 = vld [vmem:[%s169 + $0x70] sm:$0xff]
      %v192 = vld [vmem:[%s169 + $0x78] sm:$0xff]
      %v193 = vld [vmem:[%s169 + $0x80] sm:$0xff]
      %v194 = vld [vmem:[%s169 + $0x88] sm:$0xff]
      %v195 = vld [vmem:[%s169 + $0x90] sm:$0xff]
      %v196 = vld [vmem:[%s169 + $0x98] sm:$0xff]
      %v197 = vld [vmem:[%s169 + $0xa0] sm:$0xff]
      %v198 = vld [vmem:[%s169 + $0xa8] sm:$0xff]
      %v199 = vld [vmem:[%s169 + $0xb0] sm:$0xff]
      %v200 = vld [vmem:[%s169 + $0xb8] sm:$0xff]
      %v201 = vld [vmem:[%s169 + $0xc0] sm:$0xff]
      %v202 = vld [vmem:[%s169 + $0xc8] sm:$0xff]
      %v203 = vld [vmem:[%s169 + $0xd0] sm:$0xff]
      %v204 = vld [vmem:[%s169 + $0xd8] sm:$0xff]
      %v205 = vld [vmem:[%s169 + $0xe0] sm:$0xff]
      %v206 = vld [vmem:[%s169 + $0xe8] sm:$0xff]
      %v207 = vld [vmem:[%s169 + $0xf0] sm:$0xff]
      %v208 = vld [vmem:[%s169 + $0xf8] sm:$0xff]
      %v209 = vld [vmem:[%s1] sm:$0xff]
      %v210 = vld [vmem:[%s1 + $0x8] sm:$0xff]
      %v211 = vld [vmem:[%s1 + $0x10] sm:$0xff]
      %v212 = vld [vmem:[%s1 + $0x18] sm:$0xff]
      %v213 = vld [vmem:[%s1 + $0x20] sm:$0xff]
      %v214 = vld [vmem:[%s1 + $0x28] sm:$0xff]
      %v215 = vld [vmem:[%s1 + $0x30] sm:$0xff]
      %v216 = vld [vmem:[%s1 + $0x38] sm:$0xff]
      %v217 = vld [vmem:[%s1 + $0x40] sm:$0xff]
      %v218 = vld [vmem:[%s1 + $0x48] sm:$0xff]
      %v219 = vld [vmem:[%s1 + $0x50] sm:$0xff]
      %v220 = vld [vmem:[%s1 + $0x58] sm:$0xff]
      %v221 = vld [vmem:[%s1 + $0x60] sm:$0xff]
      %v222 = vld [vmem:[%s1 + $0x68] sm:$0xff]
      %v223 = vld [vmem:[%s1 + $0x70] sm:$0xff]
      %v224 = vld [vmem:[%s1 + $0x78] sm:$0xff]
      %v225 = vld [vmem:[%s1 + $0x80] sm:$0xff]
      %v226 = vld [vmem:[%s1 + $0x88] sm:$0xff]
      %v227 = vld [vmem:[%s1 + $0x90] sm:$0xff]
      %v228 = vld [vmem:[%s1 + $0x98] sm:$0xff]
      %v229 = vld [vmem:[%s1 + $0xa0] sm:$0xff]
      %v230 = vld [vmem:[%s1 + $0xa8] sm:$0xff]
      %v231 = vld [vmem:[%s1 + $0xb0] sm:$0xff]
      %v232 = vld [vmem:[%s1 + $0xb8] sm:$0xff]
      %v233 = vld [vmem:[%s1 + $0xc0] sm:$0xff]
      %v234 = vld [vmem:[%s1 + $0xc8] sm:$0xff]
      %v235 = vld [vmem:[%s1 + $0xd0] sm:$0xff]
      %v236 = vld [vmem:[%s1 + $0xd8] sm:$0xff]
      %v237 = vld [vmem:[%s1 + $0xe0] sm:$0xff]
      %v238 = vld [vmem:[%s1 + $0xe8] sm:$0xff]
      %v239 = vld [vmem:[%s1 + $0xf0] sm:$0xff]
      %v240 = vld [vmem:[%s1 + $0xf8] sm:$0xff]
      %v241 = vld [vmem:[%s2] sm:$0x1]
      %v243 = vlaneseq
      %v244 = vshrl.u32 %v243, 7
      %v245 = vsub.s32 0, %v244
      %v246 = vrot.slane %v241, %v245
      %248 = vmatprep.subr.mxu0 0.0
      %249 = vmatpush1.msra.mxu0 %v224
      %250 = vmatprep.subr.mxu0 0.0
      %251 = vmatpush1.msra.mxu0 %v223
      %252 = vmatprep.subr.mxu0 0.0
      %253 = vmatpush1.msra.mxu0 %v222
      %254 = vmatprep.subr.mxu0 0.0
      %255 = vmatpush1.msra.mxu0 %v221
      %256 = vmatprep.subr.mxu0 0.0
      %257 = vmatpush1.msra.mxu0 %v220
      %258 = vmatprep.subr.mxu0 0.0
      %259 = vmatpush1.msra.mxu0 %v219
      %260 = vmatprep.subr.mxu0 0.0
      %261 = vmatpush1.msra.mxu0 %v218
      %262 = vmatprep.subr.mxu0 0.0
      %263 = vmatpush1.msra.mxu0 %v217
      %264 = vmatprep.subr.mxu0 0.0
      %265 = vmatpush1.msra.mxu0 %v216
      %266 = vmatprep.subr.mxu0 0.0
      %267 = vmatpush1.msra.mxu0 %v215
      %268 = vmatprep.subr.mxu0 0.0
      %269 = vmatpush1.msra.mxu0 %v214
      %270 = vmatprep.subr.mxu0 0.0
      %271 = vmatpush1.msra.mxu0 %v213
      %272 = vmatprep.subr.mxu0 0.0
      %273 = vmatpush1.msra.mxu0 %v212
      %274 = vmatprep.subr.mxu0 0.0
      %275 = vmatpush1.msra.mxu0 %v211
      %276 = vmatprep.subr.mxu0 0.0
      %277 = vmatpush1.msra.mxu0 %v210
      %278 = vmatprep.subr.mxu0 0.0
      %279 = vmatpush1.msra.mxu0 %v209
      %280 = vmatprep.subr.mxu0 0.0
      %281 = vmatpush2.msra.mxu0 %v240
      %282 = vmatprep.subr.mxu0 0.0
      %283 = vmatpush2.msra.mxu0 %v239
      %284 = vmatprep.subr.mxu0 0.0
      %285 = vmatpush2.msra.mxu0 %v238
      %286 = vmatprep.subr.mxu0 0.0
      %287 = vmatpush2.msra.mxu0 %v237
      %288 = vmatprep.subr.mxu0 0.0
      %289 = vmatpush2.msra.mxu0 %v236
      %290 = vmatprep.subr.mxu0 0.0
      %291 = vmatpush2.msra.mxu0 %v235
      %292 = vmatprep.subr.mxu0 0.0
      %293 = vmatpush2.msra.mxu0 %v234
      %294 = vmatprep.subr.mxu0 0.0
      %295 = vmatpush2.msra.mxu0 %v233
      %296 = vmatprep.subr.mxu0 0.0
      %297 = vmatpush2.msra.mxu0 %v232
      %298 = vmatprep.subr.mxu0 0.0
      %299 = vmatpush2.msra.mxu0 %v231
      %300 = vmatprep.subr.mxu0 0.0
      %301 = vmatpush2.msra.mxu0 %v230
      %302 = vmatprep.subr.mxu0 0.0
      %303 = vmatpush2.msra.mxu0 %v229
      %304 = vmatprep.subr.mxu0 0.0
      %305 = vmatpush2.msra.mxu0 %v228
      %306 = vmatprep.subr.mxu0 0.0
      %307 = vmatpush2.msra.mxu0 %v227
      %308 = vmatprep.subr.mxu0 0.0
      %309 = vmatpush2.msra.mxu0 %v226
      %310 = vmatprep.subr.mxu0 0.0
      %311 = vmatpush2.msra.mxu0 %v225
      %312 = vmatprep.mubr.f32.mxu0 %v178
      %313 = vmatmul.mubr.f32.gmra.mxu0 %v177
      %v314 = vpop.f32.mrf.mxu0
      %v315 = vadd.f32 %v246, %v314
      %v316 = vpop.f32.mrf.mxu0
      %317 = vmatprep.mubr.f32.mxu0 %v180
      %318 = vmatmul.mubr.f32.gmra.mxu0 %v179
      %v319 = vpop.f32.mrf.mxu0
      %v320 = vadd.f32 %v246, %v319
      %v321 = vpop.f32.mrf.mxu0
      %322 = vmatprep.mubr.f32.mxu0 %v182
      %323 = vmatmul.mubr.f32.gmra.mxu0 %v181
      %v324 = vpop.f32.mrf.mxu0
      %v325 = vadd.f32 %v246, %v324
      %v326 = vpop.f32.mrf.mxu0
      %327 = vmatprep.mubr.f32.mxu0 %v184
      %328 = vmatmul.mubr.f32.gmra.mxu0 %v183
      %v329 = vpop.f32.mrf.mxu0
      %v330 = vadd.f32 %v246, %v329
      %v331 = vpop.f32.mrf.mxu0
      %332 = vmatprep.mubr.f32.mxu0 %v186
      %333 = vmatmul.mubr.f32.gmra.mxu0 %v185
      %v334 = vpop.f32.mrf.mxu0
      %v335 = vadd.f32 %v246, %v334
      %v336 = vpop.f32.mrf.mxu0
      %337 = vmatprep.mubr.f32.mxu0 %v188
      %338 = vmatmul.mubr.f32.gmra.mxu0 %v187
      %v339 = vpop.f32.mrf.mxu0
      %v340 = vadd.f32 %v246, %v339
      %v341 = vpop.f32.mrf.mxu0
      %342 = vmatprep.mubr.f32.mxu0 %v190
      %343 = vmatmul.mubr.f32.gmra.mxu0 %v189
      %v344 = vpop.f32.mrf.mxu0
      %v345 = vadd.f32 %v246, %v344
      %v346 = vpop.f32.mrf.mxu0
      %347 = vmatprep.mubr.f32.mxu0 %v192
      %348 = vmatmul.mubr.f32.gmra.mxu0 %v191
      %v349 = vpop.f32.mrf.mxu0
      %v350 = vadd.f32 %v246, %v349
      %v351 = vpop.f32.mrf.mxu0
      %352 = vmatprep.mubr.f32.mxu0 %v194
      %353 = vmatmul.mubr.f32.gmra.mxu0 %v193
      %v354 = vpop.f32.mrf.mxu0
      %v355 = vadd.f32 %v246, %v354
      %v356 = vpop.f32.mrf.mxu0
      %357 = vmatprep.mubr.f32.mxu0 %v196
      %358 = vmatmul.mubr.f32.gmra.mxu0 %v195
      %v359 = vpop.f32.mrf.mxu0
      %v360 = vadd.f32 %v246, %v359
      %v361 = vpop.f32.mrf.mxu0
      %362 = vmatprep.mubr.f32.mxu0 %v198
      %363 = vmatmul.mubr.f32.gmra.mxu0 %v197
      %v364 = vpop.f32.mrf.mxu0
      %v365 = vadd.f32 %v246, %v364
      %v366 = vpop.f32.mrf.mxu0
      %367 = vmatprep.mubr.f32.mxu0 %v200
      %368 = vmatmul.mubr.f32.gmra.mxu0 %v199
      %v369 = vpop.f32.mrf.mxu0
      %v370 = vadd.f32 %v246, %v369
      %v371 = vpop.f32.mrf.mxu0
      %372 = vmatprep.mubr.f32.mxu0 %v202
      %373 = vmatmul.mubr.f32.gmra.mxu0 %v201
      %v374 = vpop.f32.mrf.mxu0
      %v375 = vadd.f32 %v246, %v374
      %v376 = vpop.f32.mrf.mxu0
      %377 = vmatprep.mubr.f32.mxu0 %v204
      %378 = vmatmul.mubr.f32.gmra.mxu0 %v203
      %v379 = vpop.f32.mrf.mxu0
      %v380 = vadd.f32 %v246, %v379
      %v381 = vpop.f32.mrf.mxu0
      %382 = vmatprep.mubr.f32.mxu0 %v206
      %383 = vmatmul.mubr.f32.gmra.mxu0 %v205
      %v384 = vpop.f32.mrf.mxu0
      %v385 = vadd.f32 %v246, %v384
      %v386 = vpop.f32.mrf.mxu0
      %387 = vmatprep.mubr.f32.mxu0 %v208
      %388 = vmatmul.mubr.f32.gmra.mxu0 %v207
      %v389 = vpop.f32.mrf.mxu0
      %v390 = vadd.f32 %v246, %v389
      %v391 = vpop.f32.mrf.mxu0
      %392 = vdwg.mxu0
      %393 = vmax.xlane.f32.xlu0 %v315
      %v394 = vpop.xlane.xlu0 %393
      %395 = vmax.xlane.f32.xlu0 %v320
      %v396 = vpop.xlane.xlu0 %395
      %397 = vmax.xlane.f32.xlu0 %v325
      %v398 = vpop.xlane.xlu0 %397
      %399 = vmax.xlane.f32.xlu0 %v330
      %v400 = vpop.xlane.xlu0 %399
      %401 = vmax.xlane.f32.xlu0 %v335
      %v402 = vpop.xlane.xlu0 %401
      %403 = vmax.xlane.f32.xlu0 %v340
      %v404 = vpop.xlane.xlu0 %403
      %405 = vmax.xlane.f32.xlu0 %v345
      %v406 = vpop.xlane.xlu0 %405
      %407 = vmax.xlane.f32.xlu0 %v350
      %v408 = vpop.xlane.xlu0 %407
      %409 = vmax.xlane.f32.xlu0 %v355
      %v410 = vpop.xlane.xlu0 %409
      %411 = vmax.xlane.f32.xlu0 %v360
      %v412 = vpop.xlane.xlu0 %411
      %413 = vmax.xlane.f32.xlu0 %v365
      %v414 = vpop.xlane.xlu0 %413
      %415 = vmax.xlane.f32.xlu0 %v370
      %v416 = vpop.xlane.xlu0 %415
      %417 = vmax.xlane.f32.xlu0 %v375
      %v418 = vpop.xlane.xlu0 %417
      %419 = vmax.xlane.f32.xlu0 %v380
      %v420 = vpop.xlane.xlu0 %419
      %421 = vmax.xlane.f32.xlu0 %v385
      %v422 = vpop.xlane.xlu0 %421
      %423 = vmax.xlane.f32.xlu0 %v390
      %v424 = vpop.xlane.xlu0 %423
      %v425 = vsub.f32 %v315, %v394
      %v426 = vsub.f32 %v320, %v396
      %v427 = vsub.f32 %v325, %v398
      %v428 = vsub.f32 %v330, %v400
      %v429 = vsub.f32 %v335, %v402
      %v430 = vsub.f32 %v340, %v404
      %v431 = vsub.f32 %v345, %v406
      %v432 = vsub.f32 %v350, %v408
      %v433 = vsub.f32 %v355, %v410
      %v434 = vsub.f32 %v360, %v412
      %v435 = vsub.f32 %v365, %v414
      %v436 = vsub.f32 %v370, %v416
      %v437 = vsub.f32 %v375, %v418
      %v438 = vsub.f32 %v380, %v420
      %v439 = vsub.f32 %v385, %v422
      %v440 = vsub.f32 %v390, %v424
      %v441 = vmul.f32 %v425, 1.442695
      %v442 = vpow.pop %v441
      %v443 = vmul.f32 %v426, 1.442695
      %v444 = vpow.pop %v443
      %v445 = vmul.f32 %v427, 1.442695
      %v446 = vpow.pop %v445
      %v447 = vmul.f32 %v428, 1.442695
      %v448 = vpow.pop %v447
      %v449 = vmul.f32 %v429, 1.442695
      %v450 = vpow.pop %v449
      %v451 = vmul.f32 %v430, 1.442695
      %v452 = vpow.pop %v451
      %v453 = vmul.f32 %v431, 1.442695
      %v454 = vpow.pop %v453
      %v455 = vmul.f32 %v432, 1.442695
      %v456 = vpow.pop %v455
      %v457 = vmul.f32 %v433, 1.442695
      %v458 = vpow.pop %v457
      %v459 = vmul.f32 %v434, 1.442695
      %v460 = vpow.pop %v459
      %v461 = vmul.f32 %v435, 1.442695
      %v462 = vpow.pop %v461
      %v463 = vmul.f32 %v436, 1.442695
      %v464 = vpow.pop %v463
      %v465 = vmul.f32 %v437, 1.442695
      %v466 = vpow.pop %v465
      %v467 = vmul.f32 %v438, 1.442695
      %v468 = vpow.pop %v467
      %v469 = vmul.f32 %v439, 1.442695
      %v470 = vpow.pop %v469
      %v471 = vmul.f32 %v440, 1.442695
      %v472 = vpow.pop %v471
      %473 = vadd.xlane.f32.xlu0 %v442
      %v474 = vpop.xlane.xlu0 %473
      %475 = vadd.xlane.f32.xlu0 %v444
      %v476 = vpop.xlane.xlu0 %475
      %477 = vadd.xlane.f32.xlu0 %v446
      %v478 = vpop.xlane.xlu0 %477
      %479 = vadd.xlane.f32.xlu0 %v448
      %v480 = vpop.xlane.xlu0 %479
      %481 = vadd.xlane.f32.xlu0 %v450
      %v482 = vpop.xlane.xlu0 %481
      %483 = vadd.xlane.f32.xlu0 %v452
      %v484 = vpop.xlane.xlu0 %483
      %485 = vadd.xlane.f32.xlu0 %v454
      %v486 = vpop.xlane.xlu0 %485
      %487 = vadd.xlane.f32.xlu0 %v456
      %v488 = vpop.xlane.xlu0 %487
      %489 = vadd.xlane.f32.xlu0 %v458
      %v490 = vpop.xlane.xlu0 %489
      %491 = vadd.xlane.f32.xlu0 %v460
      %v492 = vpop.xlane.xlu0 %491
      %493 = vadd.xlane.f32.xlu0 %v462
      %v494 = vpop.xlane.xlu0 %493
      %495 = vadd.xlane.f32.xlu0 %v464
      %v496 = vpop.xlane.xlu0 %495
      %497 = vadd.xlane.f32.xlu0 %v466
      %v498 = vpop.xlane.xlu0 %497
      %499 = vadd.xlane.f32.xlu0 %v468
      %v500 = vpop.xlane.xlu0 %499
      %501 = vadd.xlane.f32.xlu0 %v470
      %v502 = vpop.xlane.xlu0 %501
      %503 = vadd.xlane.f32.xlu0 %v472
      %v504 = vpop.xlane.xlu0 %503
      %v505 = vlog2.pop %v474
      %v506 = vmul.f32 %v505, 0.6931472
      %v507 = vlog2.pop %v476
      %v508 = vmul.f32 %v507, 0.6931472
      %v509 = vlog2.pop %v478
      %v510 = vmul.f32 %v509, 0.6931472
      %v511 = vlog2.pop %v480
      %v512 = vmul.f32 %v511, 0.6931472
      %v513 = vlog2.pop %v482
      %v514 = vmul.f32 %v513, 0.6931472
      %v515 = vlog2.pop %v484
      %v516 = vmul.f32 %v515, 0.6931472
      %v517 = vlog2.pop %v486
      %v518 = vmul.f32 %v517, 0.6931472
      %v519 = vlog2.pop %v488
      %v520 = vmul.f32 %v519, 0.6931472
      %v521 = vlog2.pop %v490
      %v522 = vmul.f32 %v521, 0.6931472
      %v523 = vlog2.pop %v492
      %v524 = vmul.f32 %v523, 0.6931472
      %v525 = vlog2.pop %v494
      %v526 = vmul.f32 %v525, 0.6931472
      %v527 = vlog2.pop %v496
      %v528 = vmul.f32 %v527, 0.6931472
      %v529 = vlog2.pop %v498
      %v530 = vmul.f32 %v529, 0.6931472
      %v531 = vlog2.pop %v500
      %v532 = vmul.f32 %v531, 0.6931472
      %v533 = vlog2.pop %v502
      %v534 = vmul.f32 %v533, 0.6931472
      %v535 = vlog2.pop %v504
      %v536 = vmul.f32 %v535, 0.6931472
      %v537 = vsub.f32 %v425, %v506
      %v538 = vsub.f32 %v426, %v508
      %v539 = vsub.f32 %v427, %v510
      %v540 = vsub.f32 %v428, %v512
      %v541 = vsub.f32 %v429, %v514
      %v542 = vsub.f32 %v430, %v516
      %v543 = vsub.f32 %v431, %v518
      %v544 = vsub.f32 %v432, %v520
      %v545 = vsub.f32 %v433, %v522
      %v546 = vsub.f32 %v434, %v524
      %v547 = vsub.f32 %v435, %v526
      %v548 = vsub.f32 %v436, %v528
      %v549 = vsub.f32 %v437, %v530
      %v550 = vsub.f32 %v438, %v532
      %v551 = vsub.f32 %v439, %v534
      %v552 = vsub.f32 %v440, %v536
      %553 = vst [vmem:[%s175] sm:$0xff] %v537
      %554 = vst [vmem:[%s175 + $0x8] sm:$0xff] %v538
      %555 = vst [vmem:[%s175 + $0x10] sm:$0xff] %v539
      %556 = vst [vmem:[%s175 + $0x18] sm:$0xff] %v540
      %557 = vst [vmem:[%s175 + $0x20] sm:$0xff] %v541
      %558 = vst [vmem:[%s175 + $0x28] sm:$0xff] %v542
      %559 = vst [vmem:[%s175 + $0x30] sm:$0xff] %v543
      %560 = vst [vmem:[%s175 + $0x38] sm:$0xff] %v544
      %561 = vst [vmem:[%s175 + $0x40] sm:$0xff] %v545
      %562 = vst [vmem:[%s175 + $0x48] sm:$0xff] %v546
      %563 = vst [vmem:[%s175 + $0x50] sm:$0xff] %v547
      %564 = vst [vmem:[%s175 + $0x58] sm:$0xff] %v548
      %565 = vst [vmem:[%s175 + $0x60] sm:$0xff] %v549
      %566 = vst [vmem:[%s175 + $0x68] sm:$0xff] %v550
      %567 = vst [vmem:[%s175 + $0x70] sm:$0xff] %v551
      %568 = vst [vmem:[%s175 + $0x78] sm:$0xff] %v552
      %s569 = smul.u32 16, %s14
      %p570 = scmp.lt.s32.totalorder %s569, 31
      %s571 = scalar_select %p570, %s569, 31
      %s572 = smul.addr %s571, 8
      %s573 = scalar_lea.vmem %s3, %s572
      // Predicated region
      $region33: #{mnist_nn1_forward.1} parent=31 // pred_check
        %p574 = pneg %p100
      $region34: #{mnist_nn1_forward.1} parent=31 // pred_check_branch
        %576 = sbr.rel (%p574) target = $region36
      $region35: #{mnist_nn1_forward.1} parent=31 // pred_region
        %s577 = smul.u32 16, %s14
      $region36: #{mnist_nn1_forward.1} parent=31 // pred_fallthru
        _
    $region32: #{mnist_nn1_forward.1} parent=5 // pred_fallthru
      _
    %p578 = scmp.le.s32.totalorder 2, %s9
    // Predicated region
    $region37: #{mnist_nn1_forward.1} parent=5 // pred_check
      %p579 = pneg %p578
    $region38: #{mnist_nn1_forward.1} parent=5 // pred_check_branch
      %581 = sbr.rel (%p579) target = $region40
    $region39: #{mnist_nn1_forward.1} parent=5 // pred_region
      %s582 = ssub.s32 %s9, 2
      // Predicated region
      $region41: #{mnist_nn1_forward.1} parent=39 // pred_check
        %p583 = pneg %p106
      $region42: #{mnist_nn1_forward.1} parent=39 // pred_check_branch
        %585 = sbr.rel (%p583) target = $region44
      $region43: #{mnist_nn1_forward.1} parent=39 // pred_region
        %s586 = smul.u32 16, %s15
        %p587 = scmp.lt.s32.totalorder %s586, 31
        %s588 = scalar_select %p587, %s586, 31
        %s589 = smul.addr %s588, 8
        %s590 = scalar_lea.vmem %s3, %s589
      $region44: #{mnist_nn1_forward.1} parent=39 // pred_fallthru
        _
    $region40: #{mnist_nn1_forward.1} parent=5 // pred_fallthru
      _
  $region6: #{mnist_nn1_forward.1} parent=0 // loop_footer
    %s13 = sadd.s32 1, %s9
  $region7: #{mnist_nn1_forward.1} parent=0 // loop_footer_branch
    %8 = sbr.rel target = $region3
  $region8: #{mnist_nn1_forward.1} parent=0 // loop_exit
    _

</llo_original>
